<compile_context>
chip_gen: v5e
topology: v5e:2x2
jax: 0.10.0
libtpu: 0.0.40
codegen_flags: <defaults>
</compile_context>

<pallas_src>
import functools

import jax
import jax.numpy as jnp
from jax.experimental import pallas as pl
from jax.experimental.pallas import tpu as pltpu

INPUT_DIM = 64      # demo input_dim (module is parametric)
HIDDEN = 128
LATENT = 8
LANES = 128         # TPU lane width; all layer widths are zero-padded to this
BN_EPS = 1e-3       # module uses BatchNorm1d(..., eps=0.001) explicitly
N_MID = 8           # enc layers 1..4 + dec layers 0..3 (all 128x128 padded)


def _round_up(a, b):
  return ((a + b - 1) // b) * b


def aenet_kernel(x_ref, w_in_ref, w_mid_ref, w_out_ref, b_mid_ref, b_out_ref,
                 recon_ref, z_ref):
  """Full encoder/decoder MLP chain for one (tile_m, lanes) batch tile.

  Matmul inputs are bf16 (MXU-native), accumulation is f32; bias-add + ReLU
  stay in f32 (v5e has no bf16 VALU). Every layer is zero-padded to 128 lanes
  so each dot is a full-width MXU pass and both outputs are lane-dense stores.
  """
  h = x_ref[...]                                     # (tm, in_pad) bf16

  # Encoder layer 0: Linear(input_dim -> 128) with eval-BN folded, + ReLU.
  acc = jnp.dot(h, w_in_ref[...], preferred_element_type=jnp.float32)
  acc = jnp.maximum(acc + b_mid_ref[0], 0.0)
  h = acc.astype(jnp.bfloat16)

  # Encoder layers 1..4 (last one is 128 -> 8, zero-padded to 128 outputs).
  for l in range(1, 5):
    acc = jnp.dot(h, w_mid_ref[l - 1], preferred_element_type=jnp.float32)
    acc = jnp.maximum(acc + b_mid_ref[l], 0.0)
    h = acc.astype(jnp.bfloat16)

  # z lives in lanes [:LATENT] of the padded 128-lane register; store the
  # whole lane-dense slab and slice in the wrapper (avoids masked stores).
  z_ref[...] = acc

  # Decoder layers 0..3 (first one is 8 -> 128; padded rows of W are zero so
  # the zero-padded z lanes contribute nothing).
  for l in range(5, 9):
    acc = jnp.dot(h, w_mid_ref[l - 1], preferred_element_type=jnp.float32)
    acc = jnp.maximum(acc + b_mid_ref[l], 0.0)
    h = acc.astype(jnp.bfloat16)

  # Final decoder Linear(128 -> input_dim), no BN / ReLU.
  acc = jnp.dot(h, w_out_ref[...], preferred_element_type=jnp.float32)
  recon_ref[...] = acc + b_out_ref[...]


def _fold_bn(w, b, gamma, beta, mean, var, eps=BN_EPS):
  """Fold an eval-mode BatchNorm1d into the preceding Linear (x @ w + b)."""
  scale = gamma / jnp.sqrt(var + eps)
  w_f = w * scale[None, :]
  b_f = (b - mean) * scale + beta
  return w_f, b_f


def init_params(key, input_dim=INPUT_DIM):
  """Deterministic synthetic parameters matching AENet's layer shapes (f32)."""
  enc_dims = [(input_dim, HIDDEN), (HIDDEN, HIDDEN), (HIDDEN, HIDDEN),
              (HIDDEN, HIDDEN), (HIDDEN, LATENT)]
  dec_dims = [(LATENT, HIDDEN), (HIDDEN, HIDDEN), (HIDDEN, HIDDEN),
              (HIDDEN, HIDDEN), (HIDDEN, input_dim)]

  def linear(key, din, dout):
    kw, kb = jax.random.split(key)
    w = jax.random.normal(kw, (din, dout), jnp.float32) * (1.0 / jnp.sqrt(din))
    b = jax.random.normal(kb, (dout,), jnp.float32) * 0.01
    return w, b

  def bn(key, d):
    kg, kb, km, kv = jax.random.split(key, 4)
    gamma = 1.0 + 0.1 * jax.random.normal(kg, (d,), jnp.float32)
    beta = 0.1 * jax.random.normal(kb, (d,), jnp.float32)
    mean = 0.1 * jax.random.normal(km, (d,), jnp.float32)
    var = jax.random.uniform(kv, (d,), jnp.float32, 0.5, 1.5)
    return gamma, beta, mean, var

  keys = jax.random.split(key, 32)
  ki = iter(keys)

  enc, dec = [], []
  for (din, dout) in enc_dims:                  # every encoder layer has BN
    w, b = linear(next(ki), din, dout)
    w, b = _fold_bn(w, b, *bn(next(ki), dout))
    enc.append((w, b))
  for idx, (din, dout) in enumerate(dec_dims):
    w, b = linear(next(ki), din, dout)
    if idx < 4:                                 # last decoder Linear has no BN
      w, b = _fold_bn(w, b, *bn(next(ki), dout))
    dec.append((w, b))
  return enc, dec


def pack_params(enc, dec, input_dim):
  """Zero-pad all layers to 128 lanes, stack, and cast weights to bf16."""
  in_pad = _round_up(input_dim, LANES)

  w0, b0 = enc[0]
  w_in = jnp.zeros((in_pad, HIDDEN), jnp.float32).at[:input_dim, :].set(w0)

  mids = list(enc[1:]) + list(dec[:-1])         # 8 layers, all <=128 in/out
  w_mid = jnp.zeros((len(mids), HIDDEN, HIDDEN), jnp.float32)
  b_mid = jnp.zeros((len(mids) + 1, 1, HIDDEN), jnp.float32)
  b_mid = b_mid.at[0, 0, :b0.shape[-1]].set(b0.reshape(-1))
  for i, (w, b) in enumerate(mids):
    din, dout = w.shape
    w_mid = w_mid.at[i, :din, :dout].set(w)
    b_mid = b_mid.at[i + 1, 0, :dout].set(b.reshape(-1))

  w_last, b_last = dec[-1]
  w_out = jnp.zeros((HIDDEN, in_pad), jnp.float32).at[:, :input_dim].set(w_last)
  b_out = jnp.zeros((1, in_pad), jnp.float32).at[0, :input_dim].set(
      b_last.reshape(-1))

  return (w_in.astype(jnp.bfloat16), w_mid.astype(jnp.bfloat16),
          w_out.astype(jnp.bfloat16), b_mid, b_out)


@functools.partial(jax.jit, static_argnames=("input_dim", "tile_m"))
def aenet_forward(x, packed, *, input_dim, tile_m=1024):
  """AENet.forward (eval / no augmentation). Returns (reconstructed, z)."""
  w_in, w_mid, w_out, b_mid, b_out = packed
  in_pad = w_in.shape[0]

  x_flat = x.reshape(-1, input_dim)
  n = x_flat.shape[0]

  # Batch tiling: big tiles (MXU M-dim utilisation, amortised per-step
  # overhead), but keep >=2 parallel grid steps so both v7x TCs get work.
  n_min = _round_up(n, 8)
  cap = max(8, _round_up(n_min // 2, 8))
  tm = max(8, _round_up(min(tile_m, cap), 8))
  n_padded = _round_up(n, tm)
  grid = (n_padded // tm,)

  # Pad rows to the tile multiple and features to the lane width; bf16 input
  # halves HBM traffic and feeds the MXU natively.
  x_pad = jnp.zeros((n_padded, in_pad), jnp.bfloat16)
  x_pad = x_pad.at[:n, :input_dim].set(x_flat.astype(jnp.bfloat16))

  flops = 2 * n_padded * (in_pad * HIDDEN + N_MID * HIDDEN * HIDDEN
                          + HIDDEN * in_pad)
  bytes_accessed = (
      n_padded * in_pad * 2                                        # x (bf16)
      + (in_pad * HIDDEN + N_MID * HIDDEN * HIDDEN + HIDDEN * in_pad) * 2
      + ((N_MID + 1) * HIDDEN + in_pad) * 4                        # biases
      + n_padded * (in_pad + LANES) * 4)                           # outputs

  # Weights/biases: constant index maps (5 packed arrays, ~320 KiB in VMEM).
  const3 = lambda i: (0, 0, 0)
  const2 = lambda i: (0, 0)
  in_specs = [
      pl.BlockSpec((tm, in_pad), lambda i: (i, 0)),
      pl.BlockSpec(w_in.shape, const2),
      pl.BlockSpec(w_mid.shape, const3),
      pl.BlockSpec(w_out.shape, const2),
      pl.BlockSpec(b_mid.shape, const3),
      pl.BlockSpec(b_out.shape, const2),
  ]
  out_specs = (
      pl.BlockSpec((tm, in_pad), lambda i: (i, 0)),   # recon slab (lane-dense)
      pl.BlockSpec((tm, LANES), lambda i: (i, 0)),    # z slab     (lane-dense)
  )
  out_shape = (
      jax.ShapeDtypeStruct((n_padded, in_pad), jnp.float32),
      jax.ShapeDtypeStruct((n_padded, LANES), jnp.float32),
  )

  recon_slab, z_slab = pl.pallas_call(
      aenet_kernel,
      grid=grid,
      in_specs=in_specs,
      out_specs=out_specs,
      out_shape=out_shape,
      compiler_params=pltpu.CompilerParams(
          dimension_semantics=("parallel",)),
      cost_estimate=pl.CostEstimate(
          flops=flops, transcendentals=0, bytes_accessed=bytes_accessed),
  )(x_pad, w_in, w_mid, w_out, b_mid, b_out)

  return recon_slab[:n, :input_dim], z_slab[:n, :LATENT]


def aenet_forward_ref(x, packed, input_dim):
  """Pure-JAX reference using the SAME bf16-quantized packed weights."""
  w_in, w_mid, w_out, b_mid, b_out = packed
  in_pad = w_in.shape[0]
  x_flat = x.reshape(-1, input_dim).astype(jnp.float32)
  h = jnp.pad(x_flat, ((0, 0), (0, in_pad - input_dim))).astype(jnp.bfloat16)

  acc = jnp.maximum(
      jnp.dot(h, w_in, preferred_element_type=jnp.float32) + b_mid[0], 0.0)
  h = acc.astype(jnp.bfloat16)
  for l in range(1, 5):
    acc = jnp.maximum(
        jnp.dot(h, w_mid[l - 1], preferred_element_type=jnp.float32)
        + b_mid[l], 0.0)
    h = acc.astype(jnp.bfloat16)
  z = acc[:, :LATENT]
  for l in range(5, 9):
    acc = jnp.maximum(
        jnp.dot(h, w_mid[l - 1], preferred_element_type=jnp.float32)
        + b_mid[l], 0.0)
    h = acc.astype(jnp.bfloat16)
  recon = (jnp.dot(h, w_out, preferred_element_type=jnp.float32)
           + b_out)[:, :input_dim]
  return recon, z


def aenet_forward_ref_f32(x, enc, dec):
  """Full-precision (f32) reference for a loose structural sanity check."""
  input_dim = enc[0][0].shape[0]
  h = x.reshape(-1, input_dim).astype(jnp.float32)
  for w, b in enc:
    h = jnp.maximum(h @ w + b, 0.0)
  z = h
  d = z
  for w, b in dec[:-1]:
    d = jnp.maximum(d @ w + b, 0.0)
  w, b = dec[-1]
  return d @ w + b, z


if __name__ == "__main__":
  key = jax.random.PRNGKey(0)
  kp, kx = jax.random.split(key)

  enc, dec = init_params(kp, INPUT_DIM)
  packed = pack_params(enc, dec, INPUT_DIM)

  # x of shape (2, 8, 64); forward flattens to (-1, input_dim) -> (16, 64).
  x = jax.random.normal(kx, (2, 8, INPUT_DIM), jnp.float32)

  recon, z = aenet_forward(x, packed, input_dim=INPUT_DIM, tile_m=1024)
  recon = jax.block_until_ready(recon)
  z = jax.block_until_ready(z)

  assert recon.shape == (16, INPUT_DIM) and z.shape == (16, LATENT)

  # Tight check against a reference using the same bf16-quantized weights.
  recon_ref, z_ref = aenet_forward_ref(x, packed, INPUT_DIM)
  assert jnp.allclose(recon, recon_ref, atol=2e-3, rtol=2e-3)
  assert jnp.allclose(z, z_ref, atol=2e-3, rtol=2e-3)

  # Loose structural sanity check vs. full-f32 math (bf16 weight quantization
  # contributes ~1% relative error).
  recon32, z32 = aenet_forward_ref_f32(x, enc, dec)
  assert jnp.allclose(recon, recon32, atol=0.2, rtol=0.1)
  assert jnp.allclose(z, z32, atol=0.2, rtol=0.1)

  print("KERNEL_OK")
</pallas_src>

<mosaic_0001>
module attributes {stable_mosaic.version = 11 : i64} {
  func.func @aenet_kernel(%arg0: i32, %arg1: memref<8x128xbf16, #tpu.memory_space<vmem>>, %arg2: memref<128x128xbf16, #tpu.memory_space<vmem>>, %arg3: memref<8x128x128xbf16, #tpu.memory_space<vmem>>, %arg4: memref<128x128xbf16, #tpu.memory_space<vmem>>, %arg5: memref<9x1x128xf32, #tpu.memory_space<vmem>>, %arg6: memref<1x128xf32, #tpu.memory_space<vmem>>, %arg7: memref<8x128xf32, #tpu.memory_space<vmem>>, %arg8: memref<8x128xf32, #tpu.memory_space<vmem>>) attributes {dimension_semantics = [#tpu.dimension_semantics<parallel>], iteration_bounds = array<i64: 2>, scalar_prefetch = 0 : i64, scratch_operands = 0 : i64, tpu.core_type = #tpu.core_type<tc>, window_params = [{transform_indices = @transform_0, window_bounds = array<i64: 8, 128>}, {pipeline_mode = #tpu.pipeline_mode<synchronous>, transform_indices = @transform_1, window_bounds = array<i64: 128, 128>}, {pipeline_mode = #tpu.pipeline_mode<synchronous>, transform_indices = @transform_2, window_bounds = array<i64: 8, 128, 128>}, {pipeline_mode = #tpu.pipeline_mode<synchronous>, transform_indices = @transform_3, window_bounds = array<i64: 128, 128>}, {pipeline_mode = #tpu.pipeline_mode<synchronous>, transform_indices = @transform_4, window_bounds = array<i64: 9, 1, 128>}, {pipeline_mode = #tpu.pipeline_mode<synchronous>, transform_indices = @transform_5, window_bounds = array<i64: 1, 128>}, {transform_indices = @transform_6, window_bounds = array<i64: 8, 128>}, {transform_indices = @transform_7, window_bounds = array<i64: 8, 128>}]} {
    %c0 = arith.constant 0 : index
    %c0_0 = arith.constant 0 : index
    %0 = vector.load %arg1[%c0, %c0_0] : memref<8x128xbf16, #tpu.memory_space<vmem>>, vector<8x128xbf16>
    %c0_1 = arith.constant 0 : index
    %c0_2 = arith.constant 0 : index
    %1 = vector.load %arg2[%c0_1, %c0_2] : memref<128x128xbf16, #tpu.memory_space<vmem>>, vector<128x128xbf16>
    %cst = arith.constant dense<0.000000e+00> : vector<8x128xf32>
    %2 = tpu.matmul %0, %1, %cst {dimension_numbers = #tpu.dot_dimension_numbers<[1], [0], [0], [1], [0, 0, 1, 1], [], []>} : vector<8x128xbf16>, vector<128x128xbf16>, vector<8x128xf32> -> vector<8x128xf32>
    %c0_3 = arith.constant 0 : index
    %c0_4 = arith.constant 0 : index
    %c0_5 = arith.constant 0 : index
    %3 = vector.load %arg5[%c0_3, %c0_4, %c0_5] : memref<9x1x128xf32, #tpu.memory_space<vmem>>, vector<1x1x128xf32>
    %4 = vector.shape_cast %3 : vector<1x1x128xf32> to vector<1x128xf32>
    %5 = vector.broadcast %4 : vector<1x128xf32> to vector<8x128xf32>
    %6 = arith.addf %2, %5 : vector<8x128xf32>
    %cst_6 = arith.constant 0.000000e+00 : f32
    %7 = vector.broadcast %cst_6 : f32 to vector<8x128xf32>
    %8 = arith.maximumf %6, %7 : vector<8x128xf32>
    %9 = arith.truncf %8 : vector<8x128xf32> to vector<8x128xbf16>
    %c0_7 = arith.constant 0 : index
    %c0_8 = arith.constant 0 : index
    %c0_9 = arith.constant 0 : index
    %10 = vector.load %arg3[%c0_7, %c0_8, %c0_9] : memref<8x128x128xbf16, #tpu.memory_space<vmem>>, vector<1x128x128xbf16>
    %11 = vector.shape_cast %10 : vector<1x128x128xbf16> to vector<128x128xbf16>
    %cst_10 = arith.constant dense<0.000000e+00> : vector<8x128xf32>
    %12 = tpu.matmul %9, %11, %cst_10 {dimension_numbers = #tpu.dot_dimension_numbers<[1], [0], [0], [1], [0, 0, 1, 1], [], []>} : vector<8x128xbf16>, vector<128x128xbf16>, vector<8x128xf32> -> vector<8x128xf32>
    %c1 = arith.constant 1 : index
    %c0_11 = arith.constant 0 : index
    %c0_12 = arith.constant 0 : index
    %13 = vector.load %arg5[%c1, %c0_11, %c0_12] : memref<9x1x128xf32, #tpu.memory_space<vmem>>, vector<1x1x128xf32>
    %14 = vector.shape_cast %13 : vector<1x1x128xf32> to vector<1x128xf32>
    %15 = vector.broadcast %14 : vector<1x128xf32> to vector<8x128xf32>
    %16 = arith.addf %12, %15 : vector<8x128xf32>
    %cst_13 = arith.constant 0.000000e+00 : f32
    %17 = vector.broadcast %cst_13 : f32 to vector<8x128xf32>
    %18 = arith.maximumf %16, %17 : vector<8x128xf32>
    %19 = arith.truncf %18 : vector<8x128xf32> to vector<8x128xbf16>
    %c1_14 = arith.constant 1 : index
    %c0_15 = arith.constant 0 : index
    %c0_16 = arith.constant 0 : index
    %20 = vector.load %arg3[%c1_14, %c0_15, %c0_16] : memref<8x128x128xbf16, #tpu.memory_space<vmem>>, vector<1x128x128xbf16>
    %21 = vector.shape_cast %20 : vector<1x128x128xbf16> to vector<128x128xbf16>
    %cst_17 = arith.constant dense<0.000000e+00> : vector<8x128xf32>
    %22 = tpu.matmul %19, %21, %cst_17 {dimension_numbers = #tpu.dot_dimension_numbers<[1], [0], [0], [1], [0, 0, 1, 1], [], []>} : vector<8x128xbf16>, vector<128x128xbf16>, vector<8x128xf32> -> vector<8x128xf32>
    %c2 = arith.constant 2 : index
    %c0_18 = arith.constant 0 : index
    %c0_19 = arith.constant 0 : index
    %23 = vector.load %arg5[%c2, %c0_18, %c0_19] : memref<9x1x128xf32, #tpu.memory_space<vmem>>, vector<1x1x128xf32>
    %24 = vector.shape_cast %23 : vector<1x1x128xf32> to vector<1x128xf32>
    %25 = vector.broadcast %24 : vector<1x128xf32> to vector<8x128xf32>
    %26 = arith.addf %22, %25 : vector<8x128xf32>
    %cst_20 = arith.constant 0.000000e+00 : f32
    %27 = vector.broadcast %cst_20 : f32 to vector<8x128xf32>
    %28 = arith.maximumf %26, %27 : vector<8x128xf32>
    %29 = arith.truncf %28 : vector<8x128xf32> to vector<8x128xbf16>
    %c2_21 = arith.constant 2 : index
    %c0_22 = arith.constant 0 : index
    %c0_23 = arith.constant 0 : index
    %30 = vector.load %arg3[%c2_21, %c0_22, %c0_23] : memref<8x128x128xbf16, #tpu.memory_space<vmem>>, vector<1x128x128xbf16>
    %31 = vector.shape_cast %30 : vector<1x128x128xbf16> to vector<128x128xbf16>
    %cst_24 = arith.constant dense<0.000000e+00> : vector<8x128xf32>
    %32 = tpu.matmul %29, %31, %cst_24 {dimension_numbers = #tpu.dot_dimension_numbers<[1], [0], [0], [1], [0, 0, 1, 1], [], []>} : vector<8x128xbf16>, vector<128x128xbf16>, vector<8x128xf32> -> vector<8x128xf32>
    %c3 = arith.constant 3 : index
    %c0_25 = arith.constant 0 : index
    %c0_26 = arith.constant 0 : index
    %33 = vector.load %arg5[%c3, %c0_25, %c0_26] : memref<9x1x128xf32, #tpu.memory_space<vmem>>, vector<1x1x128xf32>
    %34 = vector.shape_cast %33 : vector<1x1x128xf32> to vector<1x128xf32>
    %35 = vector.broadcast %34 : vector<1x128xf32> to vector<8x128xf32>
    %36 = arith.addf %32, %35 : vector<8x128xf32>
    %cst_27 = arith.constant 0.000000e+00 : f32
    %37 = vector.broadcast %cst_27 : f32 to vector<8x128xf32>
    %38 = arith.maximumf %36, %37 : vector<8x128xf32>
    %39 = arith.truncf %38 : vector<8x128xf32> to vector<8x128xbf16>
    %c3_28 = arith.constant 3 : index
    %c0_29 = arith.constant 0 : index
    %c0_30 = arith.constant 0 : index
    %40 = vector.load %arg3[%c3_28, %c0_29, %c0_30] : memref<8x128x128xbf16, #tpu.memory_space<vmem>>, vector<1x128x128xbf16>
    %41 = vector.shape_cast %40 : vector<1x128x128xbf16> to vector<128x128xbf16>
    %cst_31 = arith.constant dense<0.000000e+00> : vector<8x128xf32>
    %42 = tpu.matmul %39, %41, %cst_31 {dimension_numbers = #tpu.dot_dimension_numbers<[1], [0], [0], [1], [0, 0, 1, 1], [], []>} : vector<8x128xbf16>, vector<128x128xbf16>, vector<8x128xf32> -> vector<8x128xf32>
    %c4 = arith.constant 4 : index
    %c0_32 = arith.constant 0 : index
    %c0_33 = arith.constant 0 : index
    %43 = vector.load %arg5[%c4, %c0_32, %c0_33] : memref<9x1x128xf32, #tpu.memory_space<vmem>>, vector<1x1x128xf32>
    %44 = vector.shape_cast %43 : vector<1x1x128xf32> to vector<1x128xf32>
    %45 = vector.broadcast %44 : vector<1x128xf32> to vector<8x128xf32>
    %46 = arith.addf %42, %45 : vector<8x128xf32>
    %cst_34 = arith.constant 0.000000e+00 : f32
    %47 = vector.broadcast %cst_34 : f32 to vector<8x128xf32>
    %48 = arith.maximumf %46, %47 : vector<8x128xf32>
    %49 = arith.truncf %48 : vector<8x128xf32> to vector<8x128xbf16>
    %c0_35 = arith.constant 0 : index
    %c0_36 = arith.constant 0 : index
    %50 = vector.load %arg8[%c0_35, %c0_36] : memref<8x128xf32, #tpu.memory_space<vmem>>, vector<8x128xf32>
    tpu.vector_store %arg8[%c0_35, %c0_36], %48 {strides = array<i32>} : memref<8x128xf32, #tpu.memory_space<vmem>>, vector<8x128xf32>,
    %c4_37 = arith.constant 4 : index
    %c0_38 = arith.constant 0 : index
    %c0_39 = arith.constant 0 : index
    %51 = vector.load %arg3[%c4_37, %c0_38, %c0_39] : memref<8x128x128xbf16, #tpu.memory_space<vmem>>, vector<1x128x128xbf16>
    %52 = vector.shape_cast %51 : vector<1x128x128xbf16> to vector<128x128xbf16>
    %cst_40 = arith.constant dense<0.000000e+00> : vector<8x128xf32>
    %53 = tpu.matmul %49, %52, %cst_40 {dimension_numbers = #tpu.dot_dimension_numbers<[1], [0], [0], [1], [0, 0, 1, 1], [], []>} : vector<8x128xbf16>, vector<128x128xbf16>, vector<8x128xf32> -> vector<8x128xf32>
    %c5 = arith.constant 5 : index
    %c0_41 = arith.constant 0 : index
    %c0_42 = arith.constant 0 : index
    %54 = vector.load %arg5[%c5, %c0_41, %c0_42] : memref<9x1x128xf32, #tpu.memory_space<vmem>>, vector<1x1x128xf32>
    %55 = vector.shape_cast %54 : vector<1x1x128xf32> to vector<1x128xf32>
    %56 = vector.broadcast %55 : vector<1x128xf32> to vector<8x128xf32>
    %57 = arith.addf %53, %56 : vector<8x128xf32>
    %cst_43 = arith.constant 0.000000e+00 : f32
    %58 = vector.broadcast %cst_43 : f32 to vector<8x128xf32>
    %59 = arith.maximumf %57, %58 : vector<8x128xf32>
    %60 = arith.truncf %59 : vector<8x128xf32> to vector<8x128xbf16>
    %c5_44 = arith.constant 5 : index
    %c0_45 = arith.constant 0 : index
    %c0_46 = arith.constant 0 : index
    %61 = vector.load %arg3[%c5_44, %c0_45, %c0_46] : memref<8x128x128xbf16, #tpu.memory_space<vmem>>, vector<1x128x128xbf16>
    %62 = vector.shape_cast %61 : vector<1x128x128xbf16> to vector<128x128xbf16>
    %cst_47 = arith.constant dense<0.000000e+00> : vector<8x128xf32>
    %63 = tpu.matmul %60, %62, %cst_47 {dimension_numbers = #tpu.dot_dimension_numbers<[1], [0], [0], [1], [0, 0, 1, 1], [], []>} : vector<8x128xbf16>, vector<128x128xbf16>, vector<8x128xf32> -> vector<8x128xf32>
    %c6 = arith.constant 6 : index
    %c0_48 = arith.constant 0 : index
    %c0_49 = arith.constant 0 : index
    %64 = vector.load %arg5[%c6, %c0_48, %c0_49] : memref<9x1x128xf32, #tpu.memory_space<vmem>>, vector<1x1x128xf32>
    %65 = vector.shape_cast %64 : vector<1x1x128xf32> to vector<1x128xf32>
    %66 = vector.broadcast %65 : vector<1x128xf32> to vector<8x128xf32>
    %67 = arith.addf %63, %66 : vector<8x128xf32>
    %cst_50 = arith.constant 0.000000e+00 : f32
    %68 = vector.broadcast %cst_50 : f32 to vector<8x128xf32>
    %69 = arith.maximumf %67, %68 : vector<8x128xf32>
    %70 = arith.truncf %69 : vector<8x128xf32> to vector<8x128xbf16>
    %c6_51 = arith.constant 6 : index
    %c0_52 = arith.constant 0 : index
    %c0_53 = arith.constant 0 : index
    %71 = vector.load %arg3[%c6_51, %c0_52, %c0_53] : memref<8x128x128xbf16, #tpu.memory_space<vmem>>, vector<1x128x128xbf16>
    %72 = vector.shape_cast %71 : vector<1x128x128xbf16> to vector<128x128xbf16>
    %cst_54 = arith.constant dense<0.000000e+00> : vector<8x128xf32>
    %73 = tpu.matmul %70, %72, %cst_54 {dimension_numbers = #tpu.dot_dimension_numbers<[1], [0], [0], [1], [0, 0, 1, 1], [], []>} : vector<8x128xbf16>, vector<128x128xbf16>, vector<8x128xf32> -> vector<8x128xf32>
    %c7 = arith.constant 7 : index
    %c0_55 = arith.constant 0 : index
    %c0_56 = arith.constant 0 : index
    %74 = vector.load %arg5[%c7, %c0_55, %c0_56] : memref<9x1x128xf32, #tpu.memory_space<vmem>>, vector<1x1x128xf32>
    %75 = vector.shape_cast %74 : vector<1x1x128xf32> to vector<1x128xf32>
    %76 = vector.broadcast %75 : vector<1x128xf32> to vector<8x128xf32>
    %77 = arith.addf %73, %76 : vector<8x128xf32>
    %cst_57 = arith.constant 0.000000e+00 : f32
    %78 = vector.broadcast %cst_57 : f32 to vector<8x128xf32>
    %79 = arith.maximumf %77, %78 : vector<8x128xf32>
    %80 = arith.truncf %79 : vector<8x128xf32> to vector<8x128xbf16>
    %c7_58 = arith.constant 7 : index
    %c0_59 = arith.constant 0 : index
    %c0_60 = arith.constant 0 : index
    %81 = vector.load %arg3[%c7_58, %c0_59, %c0_60] : memref<8x128x128xbf16, #tpu.memory_space<vmem>>, vector<1x128x128xbf16>
    %82 = vector.shape_cast %81 : vector<1x128x128xbf16> to vector<128x128xbf16>
    %cst_61 = arith.constant dense<0.000000e+00> : vector<8x128xf32>
    %83 = tpu.matmul %80, %82, %cst_61 {dimension_numbers = #tpu.dot_dimension_numbers<[1], [0], [0], [1], [0, 0, 1, 1], [], []>} : vector<8x128xbf16>, vector<128x128xbf16>, vector<8x128xf32> -> vector<8x128xf32>
    %c8 = arith.constant 8 : index
    %c0_62 = arith.constant 0 : index
    %c0_63 = arith.constant 0 : index
    %84 = vector.load %arg5[%c8, %c0_62, %c0_63] : memref<9x1x128xf32, #tpu.memory_space<vmem>>, vector<1x1x128xf32>
    %85 = vector.shape_cast %84 : vector<1x1x128xf32> to vector<1x128xf32>
    %86 = vector.broadcast %85 : vector<1x128xf32> to vector<8x128xf32>
    %87 = arith.addf %83, %86 : vector<8x128xf32>
    %cst_64 = arith.constant 0.000000e+00 : f32
    %88 = vector.broadcast %cst_64 : f32 to vector<8x128xf32>
    %89 = arith.maximumf %87, %88 : vector<8x128xf32>
    %90 = arith.truncf %89 : vector<8x128xf32> to vector<8x128xbf16>
    %c0_65 = arith.constant 0 : index
    %c0_66 = arith.constant 0 : index
    %91 = vector.load %arg4[%c0_65, %c0_66] : memref<128x128xbf16, #tpu.memory_space<vmem>>, vector<128x128xbf16>
    %cst_67 = arith.constant dense<0.000000e+00> : vector<8x128xf32>
    %92 = tpu.matmul %90, %91, %cst_67 {dimension_numbers = #tpu.dot_dimension_numbers<[1], [0], [0], [1], [0, 0, 1, 1], [], []>} : vector<8x128xbf16>, vector<128x128xbf16>, vector<8x128xf32> -> vector<8x128xf32>
    %c0_68 = arith.constant 0 : index
    %c0_69 = arith.constant 0 : index
    %93 = vector.load %arg6[%c0_68, %c0_69] : memref<1x128xf32, #tpu.memory_space<vmem>>, vector<1x128xf32>
    %94 = vector.broadcast %93 : vector<1x128xf32> to vector<8x128xf32>
    %95 = arith.addf %92, %94 : vector<8x128xf32>
    %c0_70 = arith.constant 0 : index
    %c0_71 = arith.constant 0 : index
    %96 = vector.load %arg7[%c0_70, %c0_71] : memref<8x128xf32, #tpu.memory_space<vmem>>, vector<8x128xf32>
    tpu.vector_store %arg7[%c0_70, %c0_71], %95 {strides = array<i32>} : memref<8x128xf32, #tpu.memory_space<vmem>>, vector<8x128xf32>,
    return
  }
  func.func @transform_0(%arg0: i32) -> (i32, i32) {
    %c0_i32 = arith.constant 0 : i32
    %c0_i32_0 = arith.constant 0 : i32
    return %arg0, %c0_i32 : i32, i32
  }
  func.func @transform_1(%arg0: i32) -> (i32, i32) {
    %c0_i32 = arith.constant 0 : i32
    %c0_i32_0 = arith.constant 0 : i32
    %c0_i32_1 = arith.constant 0 : i32
    return %c0_i32, %c0_i32_0 : i32, i32
  }
  func.func @transform_2(%arg0: i32) -> (i32, i32, i32) {
    %c0_i32 = arith.constant 0 : i32
    %c0_i32_0 = arith.constant 0 : i32
    %c0_i32_1 = arith.constant 0 : i32
    %c0_i32_2 = arith.constant 0 : i32
    return %c0_i32, %c0_i32_0, %c0_i32_1 : i32, i32, i32
  }
  func.func @transform_3(%arg0: i32) -> (i32, i32) {
    %c0_i32 = arith.constant 0 : i32
    %c0_i32_0 = arith.constant 0 : i32
    %c0_i32_1 = arith.constant 0 : i32
    return %c0_i32, %c0_i32_0 : i32, i32
  }
  func.func @transform_4(%arg0: i32) -> (i32, i32, i32) {
    %c0_i32 = arith.constant 0 : i32
    %c0_i32_0 = arith.constant 0 : i32
    %c0_i32_1 = arith.constant 0 : i32
    %c0_i32_2 = arith.constant 0 : i32
    return %c0_i32, %c0_i32_0, %c0_i32_1 : i32, i32, i32
  }
  func.func @transform_5(%arg0: i32) -> (i32, i32) {
    %c0_i32 = arith.constant 0 : i32
    %c0_i32_0 = arith.constant 0 : i32
    %c0_i32_1 = arith.constant 0 : i32
    return %c0_i32, %c0_i32_0 : i32, i32
  }
  func.func @transform_6(%arg0: i32) -> (i32, i32) {
    %c0_i32 = arith.constant 0 : i32
    %c0_i32_0 = arith.constant 0 : i32
    return %arg0, %c0_i32 : i32, i32
  }
  func.func @transform_7(%arg0: i32) -> (i32, i32) {
    %c0_i32 = arith.constant 0 : i32
    %c0_i32_0 = arith.constant 0 : i32
    return %arg0, %c0_i32 : i32, i32
  }
}

</mosaic_0001>

<llo_original>
// kernel: aenet_forward.1
$region0: #{aenet_forward.1}
  #allocation0 [shape = 'u32[]', space=smem, size = 0x4, offset = 0x4, fixed_abs, tag = 'smem constant byte address 0x4 - core index']
  #allocation1 [shape = 'u32[72,128]{1,0:T(1,128)}', space=vmem, size = 0x9000, scoped, tag = 'internal scratch']
  %s0 = inlined_call_operand.vmem [shape: bf16[16,128], index: 0, kind: input, shape index: {}]
  %s1 = inlined_call_operand.hbm [shape: bf16[128,128], index: 1, kind: input, shape index: {}]
  %s2 = inlined_call_operand.hbm [shape: bf16[8,128,128], index: 2, kind: input, shape index: {}]
  %s3 = inlined_call_operand.hbm [shape: bf16[128,128], index: 3, kind: input, shape index: {}]
  %s4 = inlined_call_operand.vmem [shape: f32[9,1,128], index: 4, kind: input, shape index: {}]
  %s5 = inlined_call_operand.vmem [shape: f32[1,128], index: 5, kind: input, shape index: {}]
  %s6 = inlined_call_operand.hbm [shape: f32[16,128], index: 6, kind: output, shape index: {0}]
  %s7 = inlined_call_operand.vmem [shape: f32[16,128], index: 7, kind: output, shape index: {1}]
  %8 = xla_tuple %s6, %s7
  %s9 = sld [smem:[#allocation0]]
  $region77: #{aenet_forward.1} parent=0
    _
  %s11 = ssub.s32 1, %s9
  %s12 = scalar_select 0, %s11, %s9
  $region1: #{aenet_forward.1} parent=0
    #allocation2 [shape = 'u8[32768]{0}', space=vmem, size = 0x8000, scoped, tag = 'input window, operand 1, single buffered']
    #allocation3 [shape = 's32[2]{0}', space=sflag, size = 0x8, scoped, tag = 'scoped memory for aenet_forward.1']
    #allocation4 [shape = 's32[2]{0}', space=sflag, size = 0x8, scoped, tag = 'scoped memory for aenet_forward.1']
    #allocation5 [shape = 'u8[262144]{0}', space=vmem, size = 0x40000, scoped, tag = 'input window, operand 2, single buffered']
    #allocation6 [shape = 's32[1]{0}', space=sflag, size = 0x4, scoped, tag = 'scoped memory for aenet_forward.1']
    #allocation7 [shape = 'u8[32768]{0}', space=vmem, size = 0x8000, scoped, tag = 'input window, operand 3, single buffered']
    #allocation8 [shape = 'u8[8192]{0}', space=vmem, size = 0x2000, scoped, tag = 'output window, operand 0']
    %13 = vsyncpa [#allocation3], 0
    %14 = vsyncpa [#allocation6], 0
    %15 = vsyncpa [#allocation4], 0
    %s16 = scalar_lea.sflag [#allocation4], 1
    %17 = vsyncpa %s16, 0
    loop: start=0, step=1, limit=4
    $region2: #{aenet_forward.1} parent=1 // loop_pre_header
      _
    $region3: #{aenet_forward.1} parent=1 // loop_header
      %s19 = sphi 0, %s23
      %p20 = scmp.ge.s32.totalorder %s19, 4
      %s29 = sphi 0, %s31
      %s32 = sphi 0, %s29
      %s33 = sphi 0, %s32
      %s49 = sphi 0, %s33
      %s53 = sphi 0, %s53
      %s55 = sphi 0, %s53
      %s56 = sphi 0, %s55
      %s70 = sphi 0, %s56
      %s74 = sphi 0, %s74
      %s76 = sphi 0, %s74
      %s77 = sphi 0, %s76
      %s91 = sphi 0, %s77
      %s95 = sphi 0, %s95
      %s97 = sphi 0, %s95
      %s98 = sphi 0, %s97
      %s112 = sphi 0, %s98
      %s116 = sphi 0, %s116
      %s118 = sphi 0, %s116
      %s119 = sphi 0, %s118
      %s133 = sphi 0, %s119
      %s137 = sphi 0, %s137
      %s139 = sphi 0, %s137
      %s140 = sphi 0, %s139
      %s154 = sphi 0, %s140
      %s160 = sphi 0, %s162
      %s163 = sphi 0, %s160
      %s164 = sphi 0, %s163
      %s180 = sphi 0, %s164
      %s186 = sphi 0, %s188
      %s189 = sphi 0, %s186
      %s190 = sphi 0, %s189
      %s206 = sphi 0, %s190
    $region4: #{aenet_forward.1} parent=1 // loop_header_branch
      %22 = sbr.rel (%p20) target = $region8
    $region5: #{aenet_forward.1} parent=1 // loop_body
      %s24 = ssub.s32 %s19, 1
      %s25 = ssub.s32 %s19, 2
      %s26 = sadd.s32 %s19, 1
      %s27 = ssub.s32 %s19, %s26
      %p28 = scmp.eq.s32.totalorder %s27, 0
      %s30 = sadd.s32 %s29, 1
      %s31 = scalar_select %p28, %s29, %s30
      %p34 = pneg %p28
      %p35 = scmp.eq.s32.totalorder %s19, 1
      %p36 = por %p34, %p35
      %p37 = scmp.ne.s32.totalorder %s29, %s32
      %p38 = scmp.eq.s32.totalorder %s19, 0
      %p39 = por %p37, %p38
      %p40 = scmp.ne.s32.totalorder %s29, %s32
      %p41 = scmp.eq.s32.totalorder %s24, 1
      %p42 = por %p40, %p41
      %p43 = scmp.ne.s32.totalorder %s32, %s33
      %p44 = scmp.eq.s32.totalorder %s24, 0
      %p45 = por %p43, %p44
      %p46 = scmp.ne.s32.totalorder %s32, %s33
      %p47 = scmp.eq.s32.totalorder %s25, 1
      %p48 = por %p46, %p47
      %p50 = scmp.ne.s32.totalorder %s33, %s49
      %p51 = scmp.eq.s32.totalorder %s25, 0
      %p52 = por %p50, %p51
      %s54 = sadd.s32 %s53, 1
      %p57 = scmp.eq.s32.totalorder %s19, 1
      %p58 = scmp.ne.s32.totalorder %s53, %s55
      %p59 = scmp.eq.s32.totalorder %s19, 0
      %p60 = por %p58, %p59
      %p61 = scmp.ne.s32.totalorder %s53, %s55
      %p62 = scmp.eq.s32.totalorder %s24, 1
      %p63 = por %p61, %p62
      %p64 = scmp.ne.s32.totalorder %s55, %s56
      %p65 = scmp.eq.s32.totalorder %s24, 0
      %p66 = por %p64, %p65
      %p67 = scmp.ne.s32.totalorder %s55, %s56
      %p68 = scmp.eq.s32.totalorder %s25, 1
      %p69 = por %p67, %p68
      %p71 = scmp.ne.s32.totalorder %s56, %s70
      %p72 = scmp.eq.s32.totalorder %s25, 0
      %p73 = por %p71, %p72
      %s75 = sadd.s32 %s74, 1
      %p78 = scmp.eq.s32.totalorder %s19, 1
      %p79 = scmp.ne.s32.totalorder %s74, %s76
      %p80 = scmp.eq.s32.totalorder %s19, 0
      %p81 = por %p79, %p80
      %p82 = scmp.ne.s32.totalorder %s74, %s76
      %p83 = scmp.eq.s32.totalorder %s24, 1
      %p84 = por %p82, %p83
      %p85 = scmp.ne.s32.totalorder %s76, %s77
      %p86 = scmp.eq.s32.totalorder %s24, 0
      %p87 = por %p85, %p86
      %p88 = scmp.ne.s32.totalorder %s76, %s77
      %p89 = scmp.eq.s32.totalorder %s25, 1
      %p90 = por %p88, %p89
      %p92 = scmp.ne.s32.totalorder %s77, %s91
      %p93 = scmp.eq.s32.totalorder %s25, 0
      %p94 = por %p92, %p93
      %s96 = sadd.s32 %s95, 1
      %p99 = scmp.eq.s32.totalorder %s19, 1
      %p100 = scmp.ne.s32.totalorder %s95, %s97
      %p101 = scmp.eq.s32.totalorder %s19, 0
      %p102 = por %p100, %p101
      %p103 = scmp.ne.s32.totalorder %s95, %s97
      %p104 = scmp.eq.s32.totalorder %s24, 1
      %p105 = por %p103, %p104
      %p106 = scmp.ne.s32.totalorder %s97, %s98
      %p107 = scmp.eq.s32.totalorder %s24, 0
      %p108 = por %p106, %p107
      %p109 = scmp.ne.s32.totalorder %s97, %s98
      %p110 = scmp.eq.s32.totalorder %s25, 1
      %p111 = por %p109, %p110
      %p113 = scmp.ne.s32.totalorder %s98, %s112
      %p114 = scmp.eq.s32.totalorder %s25, 0
      %p115 = por %p113, %p114
      %s117 = sadd.s32 %s116, 1
      %p120 = scmp.eq.s32.totalorder %s19, 1
      %p121 = scmp.ne.s32.totalorder %s116, %s118
      %p122 = scmp.eq.s32.totalorder %s19, 0
      %p123 = por %p121, %p122
      %p124 = scmp.ne.s32.totalorder %s116, %s118
      %p125 = scmp.eq.s32.totalorder %s24, 1
      %p126 = por %p124, %p125
      %p127 = scmp.ne.s32.totalorder %s118, %s119
      %p128 = scmp.eq.s32.totalorder %s24, 0
      %p129 = por %p127, %p128
      %p130 = scmp.ne.s32.totalorder %s118, %s119
      %p131 = scmp.eq.s32.totalorder %s25, 1
      %p132 = por %p130, %p131
      %p134 = scmp.ne.s32.totalorder %s119, %s133
      %p135 = scmp.eq.s32.totalorder %s25, 0
      %p136 = por %p134, %p135
      %s138 = sadd.s32 %s137, 1
      %p141 = scmp.eq.s32.totalorder %s19, 1
      %p142 = scmp.ne.s32.totalorder %s137, %s139
      %p143 = scmp.eq.s32.totalorder %s19, 0
      %p144 = por %p142, %p143
      %p145 = scmp.ne.s32.totalorder %s137, %s139
      %p146 = scmp.eq.s32.totalorder %s24, 1
      %p147 = por %p145, %p146
      %p148 = scmp.ne.s32.totalorder %s139, %s140
      %p149 = scmp.eq.s32.totalorder %s24, 0
      %p150 = por %p148, %p149
      %p151 = scmp.ne.s32.totalorder %s139, %s140
      %p152 = scmp.eq.s32.totalorder %s25, 1
      %p153 = por %p151, %p152
      %p155 = scmp.ne.s32.totalorder %s140, %s154
      %p156 = scmp.eq.s32.totalorder %s25, 0
      %p157 = por %p155, %p156
      %s158 = ssub.s32 %s19, %s26
      %p159 = scmp.eq.s32.totalorder %s158, 0
      %s161 = sadd.s32 %s160, 1
      %s162 = scalar_select %p159, %s160, %s161
      %p165 = pneg %p159
      %p166 = scmp.eq.s32.totalorder %s19, 1
      %p167 = por %p165, %p166
      %p168 = scmp.ne.s32.totalorder %s160, %s163
      %p169 = scmp.eq.s32.totalorder %s19, 0
      %p170 = por %p168, %p169
      %p171 = scmp.ne.s32.totalorder %s160, %s163
      %p172 = scmp.eq.s32.totalorder %s24, 1
      %p173 = por %p171, %p172
      %p174 = scmp.ne.s32.totalorder %s163, %s164
      %p175 = scmp.eq.s32.totalorder %s24, 0
      %p176 = por %p174, %p175
      %p177 = scmp.ne.s32.totalorder %s163, %s164
      %p178 = scmp.eq.s32.totalorder %s25, 1
      %p179 = por %p177, %p178
      %p181 = scmp.ne.s32.totalorder %s164, %s180
      %p182 = scmp.eq.s32.totalorder %s25, 0
      %p183 = por %p181, %p182
      %s184 = ssub.s32 %s19, %s26
      %p185 = scmp.eq.s32.totalorder %s184, 0
      %s187 = sadd.s32 %s186, 1
      %s188 = scalar_select %p185, %s186, %s187
      %p191 = pneg %p185
      %p192 = scmp.eq.s32.totalorder %s19, 1
      %p193 = por %p191, %p192
      %p194 = scmp.ne.s32.totalorder %s186, %s189
      %p195 = scmp.eq.s32.totalorder %s19, 0
      %p196 = por %p194, %p195
      %p197 = scmp.ne.s32.totalorder %s186, %s189
      %p198 = scmp.eq.s32.totalorder %s24, 1
      %p199 = por %p197, %p198
      %p200 = scmp.ne.s32.totalorder %s189, %s190
      %p201 = scmp.eq.s32.totalorder %s24, 0
      %p202 = por %p200, %p201
      %p203 = scmp.ne.s32.totalorder %s189, %s190
      %p204 = scmp.eq.s32.totalorder %s25, 1
      %p205 = por %p203, %p204
      %p207 = scmp.ne.s32.totalorder %s190, %s206
      %p208 = scmp.eq.s32.totalorder %s25, 0
      %p209 = por %p207, %p208
      %p210 = scmp.le.s32.totalorder 1, %s19
      %p211 = scmp.lt.s32.totalorder %s19, 3
      %p212 = pnand %p210, %p211
      %p213 = pneg %p212
      // Predicated region
      $region9: #{aenet_forward.1} parent=5 // pred_check
        _
      $region10: #{aenet_forward.1} parent=5 // pred_check_branch
        %215 = sbr.rel (%p212) target = $region12
      $region11: #{aenet_forward.1} parent=5 // pred_region
        %s216 = ssub.s32 %s19, 1
        // Predicated region
        $region13: #{aenet_forward.1} parent=11 // pred_check
          %p217 = pneg %p66
        $region14: #{aenet_forward.1} parent=11 // pred_check_branch
          %219 = sbr.rel (%p217) target = $region16
        $region15: #{aenet_forward.1} parent=11 // pred_region
          %221 = vsyncadd [#allocation3], 0
          %s222 = sshll.u32 %s1, 4
          %s223 = int_to_ptr.hbm [resolvable:$true] %s222
          %s224 = sshll.u32 [#allocation2], 4
          %s225 = int_to_ptr.vmem [resolvable:$true] %s224
          %230 = dma.hbm_to_vmem [thread:$0]  %s223, 1024, %s225, [#allocation3], 64, 64, 4
        $region16: #{aenet_forward.1} parent=11 // pred_fallthru
          _
        // Predicated region
        $region17: #{aenet_forward.1} parent=11 // pred_check
          %p231 = pneg %p87
        $region18: #{aenet_forward.1} parent=11 // pred_check_branch
          %233 = sbr.rel (%p231) target = $region20
        $region19: #{aenet_forward.1} parent=11 // pred_region
          %235 = vsyncadd [#allocation6], 0
          %s236 = sshll.u32 %s2, 4
          %s237 = int_to_ptr.hbm [resolvable:$true] %s236
          %s238 = sshll.u32 [#allocation5], 4
          %s239 = int_to_ptr.vmem [resolvable:$true] %s238
          %244 = dma.hbm_to_vmem [thread:$0]  %s237, 8192, %s239, [#allocation6], 64, 64, 4
        $region20: #{aenet_forward.1} parent=11 // pred_fallthru
          _
        // Predicated region
        $region21: #{aenet_forward.1} parent=11 // pred_check
          %p245 = pneg %p108
        $region22: #{aenet_forward.1} parent=11 // pred_check_branch
          %247 = sbr.rel (%p245) target = $region24
        $region23: #{aenet_forward.1} parent=11 // pred_region
          %249 = vsyncadd [#allocation6], 0
          %s250 = sshll.u32 %s3, 4
          %s251 = int_to_ptr.hbm [resolvable:$true] %s250
          %s252 = sshll.u32 [#allocation7], 4
          %s253 = int_to_ptr.vmem [resolvable:$true] %s252
          %258 = dma.hbm_to_vmem [thread:$0]  %s251, 1024, %s253, [#allocation6], 64, 64, 4
        $region24: #{aenet_forward.1} parent=11 // pred_fallthru
          _
        // Predicated region
        $region25: #{aenet_forward.1} parent=11 // pred_check
          %p259 = pneg %p129
        $region26: #{aenet_forward.1} parent=11 // pred_check_branch
          %261 = sbr.rel (%p259) target = $region28
        $region27: #{aenet_forward.1} parent=11 // pred_region
          _
        $region28: #{aenet_forward.1} parent=11 // pred_fallthru
          _
        // Predicated region
        $region29: #{aenet_forward.1} parent=11 // pred_check
          %p262 = pneg %p150
        $region30: #{aenet_forward.1} parent=11 // pred_check_branch
          %264 = sbr.rel (%p262) target = $region32
        $region31: #{aenet_forward.1} parent=11 // pred_region
          _
        $region32: #{aenet_forward.1} parent=11 // pred_fallthru
          _
      $region12: #{aenet_forward.1} parent=5 // pred_fallthru
        _
      %p265 = scmp.lt.s32.totalorder %s19, 2
      // Predicated region
      $region33: #{aenet_forward.1} parent=5 // pred_check
        %p266 = pneg %p265
      $region34: #{aenet_forward.1} parent=5 // pred_check_branch
        %268 = sbr.rel (%p266) target = $region36
      $region35: #{aenet_forward.1} parent=5 // pred_region
        // Predicated region
        $region37: #{aenet_forward.1} parent=35 // pred_check
          %p269 = pneg %p39
        $region38: #{aenet_forward.1} parent=35 // pred_check_branch
          %271 = sbr.rel (%p269) target = $region40
        $region39: #{aenet_forward.1} parent=35 // pred_region
          %p272 = scmp.lt.s32.totalorder %s19, 1
          %s273 = scalar_select %p272, %s19, 1
          %s274 = smul.addr %s273, 4
          %s275 = scalar_lea.vmem %s0, %s274
        $region40: #{aenet_forward.1} parent=35 // pred_fallthru
          _
      $region36: #{aenet_forward.1} parent=5 // pred_fallthru
        _
      %p276 = scmp.le.s32.totalorder 1, %s19
      %p277 = scmp.lt.s32.totalorder %s19, 3
      %p278 = pnand %p276, %p277
      %p279 = pneg %p278
      // Predicated region
      $region41: #{aenet_forward.1} parent=5 // pred_check
        _
      $region42: #{aenet_forward.1} parent=5 // pred_check_branch
        %281 = sbr.rel (%p278) target = $region44
      $region43: #{aenet_forward.1} parent=5 // pred_region
        %s282 = ssub.s32 %s19, 1
        // Predicated region
        $region45: #{aenet_forward.1} parent=43 // pred_check
          %p283 = pneg %p66
        $region46: #{aenet_forward.1} parent=43 // pred_check_branch
          %285 = sbr.rel (%p283) target = $region48
        $region47: #{aenet_forward.1} parent=43 // pred_region
          %287 = dma.done [#allocation3], 1024
        $region48: #{aenet_forward.1} parent=43 // pred_fallthru
          _
        // Predicated region
        $region49: #{aenet_forward.1} parent=43 // pred_check
          %p288 = pneg %p87
        $region50: #{aenet_forward.1} parent=43 // pred_check_branch
          %290 = sbr.rel (%p288) target = $region52
        $region51: #{aenet_forward.1} parent=43 // pred_region
          %292 = dma.done [#allocation6], 8192
        $region52: #{aenet_forward.1} parent=43 // pred_fallthru
          _
        // Predicated region
        $region53: #{aenet_forward.1} parent=43 // pred_check
          %p293 = pneg %p108
        $region54: #{aenet_forward.1} parent=43 // pred_check_branch
          %295 = sbr.rel (%p293) target = $region56
        $region55: #{aenet_forward.1} parent=43 // pred_region
          %297 = dma.done [#allocation6], 1024
        $region56: #{aenet_forward.1} parent=43 // pred_fallthru
          _
        %p298 = scmp.lt.s32.totalorder %s24, 1
        %s299 = scalar_select %p298, %s24, 1
        %s300 = smul.addr %s299, 4
        %s301 = scalar_lea.vmem %s0, %s300
        %p302 = pneg %p45
        %p303 = pneg %p42
        %p304 = pneg %p66
        %p305 = pneg %p63
        %p306 = pneg %p87
        %p307 = pneg %p84
        %p308 = pneg %p108
        %p309 = pneg %p105
        %p310 = pneg %p129
        %p311 = pneg %p126
        %p312 = pneg %p150
        %p313 = pneg %p147
        %p314 = pneg %p176
        %p315 = pneg %p173
        %s316 = sand.u32 %s163, 1
        %s317 = scalar_lea.sflag [#allocation4], %s316
        %s318 = sand.u32 %s163, 1
        %s319 = smul.addr %s318, 8
        %s320 = scalar_lea.vmem [#allocation8], %s319
        %p321 = pneg %p202
        %p322 = pneg %p199
        %p323 = scmp.lt.s32.totalorder %s24, 1
        %s324 = scalar_select %p323, %s24, 1
        %s325 = smul.addr %s324, 8
        %s326 = scalar_lea.vmem %s7, %s325
        %p327 = scmp.lt.s32.totalorder %s24, 1
        %s328 = scalar_select %p327, %s24, 1
        %s329 = smul.addr %s328, 4
        %s330 = scalar_lea.vmem %s0, %s329
        %p331 = scmp.lt.s32.totalorder %s24, 1
        %s332 = scalar_select %p331, %s24, 1
        %s333 = smul.addr %s332, 8
        %s334 = scalar_lea.vmem %s7, %s333
        %v335 = vld [vmem:[%s330] sm:$0xf]
        %v336 = vld [vmem:[#allocation2] sm:$0xf]
        %v337 = vld [vmem:[#allocation2 + $0x4] sm:$0xf]
        %v338 = vld [vmem:[#allocation2 + $0x8] sm:$0xf]
        %v339 = vld [vmem:[#allocation2 + $0xc] sm:$0xf]
        %v340 = vld [vmem:[#allocation2 + $0x10] sm:$0xf]
        %v341 = vld [vmem:[#allocation2 + $0x14] sm:$0xf]
        %v342 = vld [vmem:[#allocation2 + $0x18] sm:$0xf]
        %v343 = vld [vmem:[#allocation2 + $0x1c] sm:$0xf]
        %v344 = vld [vmem:[#allocation2 + $0x20] sm:$0xf]
        %v345 = vld [vmem:[#allocation2 + $0x24] sm:$0xf]
        %v346 = vld [vmem:[#allocation2 + $0x28] sm:$0xf]
        %v347 = vld [vmem:[#allocation2 + $0x2c] sm:$0xf]
        %v348 = vld [vmem:[#allocation2 + $0x30] sm:$0xf]
        %v349 = vld [vmem:[#allocation2 + $0x34] sm:$0xf]
        %v350 = vld [vmem:[#allocation2 + $0x38] sm:$0xf]
        %v351 = vld [vmem:[#allocation2 + $0x3c] sm:$0xf]
        %v352 = vld [vmem:[%s4] sm:$0x1]
        %v354 = vperm.slane %v352, 0
        %v372 = vunpack.c.l.b16 %v336
        %v373 = vunpack.c.l.b16 %v337
        %v374 = vunpack.c.l.b16 %v338
        %v375 = vunpack.c.l.b16 %v339
        %v376 = vunpack.c.l.b16 %v340
        %v377 = vunpack.c.l.b16 %v341
        %v378 = vunpack.c.l.b16 %v342
        %v379 = vunpack.c.l.b16 %v343
        %v380 = vunpack.c.l.b16 %v344
        %v381 = vunpack.c.l.b16 %v345
        %v382 = vunpack.c.l.b16 %v346
        %v383 = vunpack.c.l.b16 %v347
        %v384 = vunpack.c.l.b16 %v348
        %v385 = vunpack.c.l.b16 %v349
        %v386 = vunpack.c.l.b16 %v350
        %v387 = vunpack.c.l.b16 %v351
        %v388 = vpack.c.b16 %v373, %v372
        %v389 = vpack.c.b16 %v375, %v374
        %v390 = vpack.c.b16 %v377, %v376
        %v391 = vpack.c.b16 %v379, %v378
        %v392 = vpack.c.b16 %v381, %v380
        %v393 = vpack.c.b16 %v383, %v382
        %v394 = vpack.c.b16 %v385, %v384
        %v395 = vpack.c.b16 %v387, %v386
        %404 = vmatpush.bf16.msra.mxu0 %v395
        %405 = vmatpush.bf16.msra.mxu0 %v394
        %406 = vmatpush.bf16.msra.mxu0 %v393
        %407 = vmatpush.bf16.msra.mxu0 %v392
        %408 = vmatpush.bf16.msra.mxu0 %v391
        %409 = vmatpush.bf16.msra.mxu0 %v390
        %410 = vmatpush.bf16.msra.mxu0 %v389
        %411 = vmatpush.bf16.msra.mxu0 %v388
        %412 = vmatmul.bf16.gmra.mxu0 %v335
        %v413 = vpop.f32.mrf.mxu0
        %v414 = vadd.f32 %v354, %v413
        %v415 = vpop.f32.mrf.mxu0
        %416 = vdwg.mxu0
        %v417 = vmax.f32 %v414, 0.0
        %v418 = vpack.c.bf16 %v417, %v417
        %v419 = vld [vmem:[#allocation5] sm:$0xf]
        %v420 = vld [vmem:[#allocation5 + $0x4] sm:$0xf]
        %v421 = vld [vmem:[#allocation5 + $0x8] sm:$0xf]
        %v422 = vld [vmem:[#allocation5 + $0xc] sm:$0xf]
        %v423 = vld [vmem:[#allocation5 + $0x10] sm:$0xf]
        %v424 = vld [vmem:[#allocation5 + $0x14] sm:$0xf]
        %v425 = vld [vmem:[#allocation5 + $0x18] sm:$0xf]
        %v426 = vld [vmem:[#allocation5 + $0x1c] sm:$0xf]
        %v427 = vld [vmem:[#allocation5 + $0x20] sm:$0xf]
        %v428 = vld [vmem:[#allocation5 + $0x24] sm:$0xf]
        %v429 = vld [vmem:[#allocation5 + $0x28] sm:$0xf]
        %v430 = vld [vmem:[#allocation5 + $0x2c] sm:$0xf]
        %v431 = vld [vmem:[#allocation5 + $0x30] sm:$0xf]
        %v432 = vld [vmem:[#allocation5 + $0x34] sm:$0xf]
        %v433 = vld [vmem:[#allocation5 + $0x38] sm:$0xf]
        %v434 = vld [vmem:[#allocation5 + $0x3c] sm:$0xf]
        %s435 = scalar_lea.vmem %s4, 1
        %v436 = vld [vmem:[%s435] sm:$0x1]
        %v438 = vperm.slane %v436, 0
        %v456 = vunpack.c.l.b16 %v419
        %v457 = vunpack.c.l.b16 %v420
        %v458 = vunpack.c.l.b16 %v421
        %v459 = vunpack.c.l.b16 %v422
        %v460 = vunpack.c.l.b16 %v423
        %v461 = vunpack.c.l.b16 %v424
        %v462 = vunpack.c.l.b16 %v425
        %v463 = vunpack.c.l.b16 %v426
        %v464 = vunpack.c.l.b16 %v427
        %v465 = vunpack.c.l.b16 %v428
        %v466 = vunpack.c.l.b16 %v429
        %v467 = vunpack.c.l.b16 %v430
        %v468 = vunpack.c.l.b16 %v431
        %v469 = vunpack.c.l.b16 %v432
        %v470 = vunpack.c.l.b16 %v433
        %v471 = vunpack.c.l.b16 %v434
        %v472 = vpack.c.b16 %v457, %v456
        %v473 = vpack.c.b16 %v459, %v458
        %v474 = vpack.c.b16 %v461, %v460
        %v475 = vpack.c.b16 %v463, %v462
        %v476 = vpack.c.b16 %v465, %v464
        %v477 = vpack.c.b16 %v467, %v466
        %v478 = vpack.c.b16 %v469, %v468
        %v479 = vpack.c.b16 %v471, %v470
        %488 = vmatpush.bf16.msra.mxu0 %v479
        %489 = vmatpush.bf16.msra.mxu0 %v478
        %490 = vmatpush.bf16.msra.mxu0 %v477
        %491 = vmatpush.bf16.msra.mxu0 %v476
        %492 = vmatpush.bf16.msra.mxu0 %v475
        %493 = vmatpush.bf16.msra.mxu0 %v474
        %494 = vmatpush.bf16.msra.mxu0 %v473
        %495 = vmatpush.bf16.msra.mxu0 %v472
        %496 = vmatmul.bf16.gmra.mxu0 %v418
        %v497 = vpop.f32.mrf.mxu0
        %v498 = vadd.f32 %v438, %v497
        %v499 = vpop.f32.mrf.mxu0
        %500 = vdwg.mxu0
        %v501 = vmax.f32 %v498, 0.0
        %v502 = vpack.c.bf16 %v501, %v501
        %s503 = scalar_lea.vmem [#allocation5], 64
        %v504 = vld [vmem:[%s503] sm:$0xf]
        %v505 = vld [vmem:[%s503 + $0x4] sm:$0xf]
        %v506 = vld [vmem:[%s503 + $0x8] sm:$0xf]
        %v507 = vld [vmem:[%s503 + $0xc] sm:$0xf]
        %v508 = vld [vmem:[%s503 + $0x10] sm:$0xf]
        %v509 = vld [vmem:[%s503 + $0x14] sm:$0xf]
        %v510 = vld [vmem:[%s503 + $0x18] sm:$0xf]
        %v511 = vld [vmem:[%s503 + $0x1c] sm:$0xf]
        %v512 = vld [vmem:[%s503 + $0x20] sm:$0xf]
        %v513 = vld [vmem:[%s503 + $0x24] sm:$0xf]
        %v514 = vld [vmem:[%s503 + $0x28] sm:$0xf]
        %v515 = vld [vmem:[%s503 + $0x2c] sm:$0xf]
        %v516 = vld [vmem:[%s503 + $0x30] sm:$0xf]
        %v517 = vld [vmem:[%s503 + $0x34] sm:$0xf]
        %v518 = vld [vmem:[%s503 + $0x38] sm:$0xf]
        %v519 = vld [vmem:[%s503 + $0x3c] sm:$0xf]
        %s520 = scalar_lea.vmem %s4, 2
        %v521 = vld [vmem:[%s520] sm:$0x1]
        %v523 = vperm.slane %v521, 0
        %v541 = vunpack.c.l.b16 %v504
        %v542 = vunpack.c.l.b16 %v505
        %v543 = vunpack.c.l.b16 %v506
        %v544 = vunpack.c.l.b16 %v507
        %v545 = vunpack.c.l.b16 %v508
        %v546 = vunpack.c.l.b16 %v509
        %v547 = vunpack.c.l.b16 %v510
        %v548 = vunpack.c.l.b16 %v511
        %v549 = vunpack.c.l.b16 %v512
        %v550 = vunpack.c.l.b16 %v513
        %v551 = vunpack.c.l.b16 %v514
        %v552 = vunpack.c.l.b16 %v515
        %v553 = vunpack.c.l.b16 %v516
        %v554 = vunpack.c.l.b16 %v517
        %v555 = vunpack.c.l.b16 %v518
        %v556 = vunpack.c.l.b16 %v519
        %v557 = vpack.c.b16 %v542, %v541
        %v558 = vpack.c.b16 %v544, %v543
        %v559 = vpack.c.b16 %v546, %v545
        %v560 = vpack.c.b16 %v548, %v547
        %v561 = vpack.c.b16 %v550, %v549
        %v562 = vpack.c.b16 %v552, %v551
        %v563 = vpack.c.b16 %v554, %v553
        %v564 = vpack.c.b16 %v556, %v555
        %573 = vmatpush.bf16.msra.mxu0 %v564
        %574 = vmatpush.bf16.msra.mxu0 %v563
        %575 = vmatpush.bf16.msra.mxu0 %v562
        %576 = vmatpush.bf16.msra.mxu0 %v561
        %577 = vmatpush.bf16.msra.mxu0 %v560
        %578 = vmatpush.bf16.msra.mxu0 %v559
        %579 = vmatpush.bf16.msra.mxu0 %v558
        %580 = vmatpush.bf16.msra.mxu0 %v557
        %581 = vmatmul.bf16.gmra.mxu0 %v502
        %v582 = vpop.f32.mrf.mxu0
        %v583 = vadd.f32 %v523, %v582
        %v584 = vpop.f32.mrf.mxu0
        %585 = vdwg.mxu0
        %v586 = vmax.f32 %v583, 0.0
        %v587 = vpack.c.bf16 %v586, %v586
        %s588 = scalar_lea.vmem [#allocation5], 128
        %v589 = vld [vmem:[%s588] sm:$0xf]
        %v590 = vld [vmem:[%s588 + $0x4] sm:$0xf]
        %v591 = vld [vmem:[%s588 + $0x8] sm:$0xf]
        %v592 = vld [vmem:[%s588 + $0xc] sm:$0xf]
        %v593 = vld [vmem:[%s588 + $0x10] sm:$0xf]
        %v594 = vld [vmem:[%s588 + $0x14] sm:$0xf]
        %v595 = vld [vmem:[%s588 + $0x18] sm:$0xf]
        %v596 = vld [vmem:[%s588 + $0x1c] sm:$0xf]
        %v597 = vld [vmem:[%s588 + $0x20] sm:$0xf]
        %v598 = vld [vmem:[%s588 + $0x24] sm:$0xf]
        %v599 = vld [vmem:[%s588 + $0x28] sm:$0xf]
        %v600 = vld [vmem:[%s588 + $0x2c] sm:$0xf]
        %v601 = vld [vmem:[%s588 + $0x30] sm:$0xf]
        %v602 = vld [vmem:[%s588 + $0x34] sm:$0xf]
        %v603 = vld [vmem:[%s588 + $0x38] sm:$0xf]
        %v604 = vld [vmem:[%s588 + $0x3c] sm:$0xf]
        %s605 = scalar_lea.vmem %s4, 3
        %v606 = vld [vmem:[%s605] sm:$0x1]
        %v608 = vperm.slane %v606, 0
        %v626 = vunpack.c.l.b16 %v589
        %v627 = vunpack.c.l.b16 %v590
        %v628 = vunpack.c.l.b16 %v591
        %v629 = vunpack.c.l.b16 %v592
        %v630 = vunpack.c.l.b16 %v593
        %v631 = vunpack.c.l.b16 %v594
        %v632 = vunpack.c.l.b16 %v595
        %v633 = vunpack.c.l.b16 %v596
        %v634 = vunpack.c.l.b16 %v597
        %v635 = vunpack.c.l.b16 %v598
        %v636 = vunpack.c.l.b16 %v599
        %v637 = vunpack.c.l.b16 %v600
        %v638 = vunpack.c.l.b16 %v601
        %v639 = vunpack.c.l.b16 %v602
        %v640 = vunpack.c.l.b16 %v603
        %v641 = vunpack.c.l.b16 %v604
        %v642 = vpack.c.b16 %v627, %v626
        %v643 = vpack.c.b16 %v629, %v628
        %v644 = vpack.c.b16 %v631, %v630
        %v645 = vpack.c.b16 %v633, %v632
        %v646 = vpack.c.b16 %v635, %v634
        %v647 = vpack.c.b16 %v637, %v636
        %v648 = vpack.c.b16 %v639, %v638
        %v649 = vpack.c.b16 %v641, %v640
        %658 = vmatpush.bf16.msra.mxu0 %v649
        %659 = vmatpush.bf16.msra.mxu0 %v648
        %660 = vmatpush.bf16.msra.mxu0 %v647
        %661 = vmatpush.bf16.msra.mxu0 %v646
        %662 = vmatpush.bf16.msra.mxu0 %v645
        %663 = vmatpush.bf16.msra.mxu0 %v644
        %664 = vmatpush.bf16.msra.mxu0 %v643
        %665 = vmatpush.bf16.msra.mxu0 %v642
        %666 = vmatmul.bf16.gmra.mxu0 %v587
        %v667 = vpop.f32.mrf.mxu0
        %v668 = vadd.f32 %v608, %v667
        %v669 = vpop.f32.mrf.mxu0
        %670 = vdwg.mxu0
        %v671 = vmax.f32 %v668, 0.0
        %v672 = vpack.c.bf16 %v671, %v671
        %s673 = scalar_lea.vmem [#allocation5], 192
        %v674 = vld [vmem:[%s673] sm:$0xf]
        %v675 = vld [vmem:[%s673 + $0x4] sm:$0xf]
        %v676 = vld [vmem:[%s673 + $0x8] sm:$0xf]
        %v677 = vld [vmem:[%s673 + $0xc] sm:$0xf]
        %v678 = vld [vmem:[%s673 + $0x10] sm:$0xf]
        %v679 = vld [vmem:[%s673 + $0x14] sm:$0xf]
        %v680 = vld [vmem:[%s673 + $0x18] sm:$0xf]
        %v681 = vld [vmem:[%s673 + $0x1c] sm:$0xf]
        %v682 = vld [vmem:[%s673 + $0x20] sm:$0xf]
        %v683 = vld [vmem:[%s673 + $0x24] sm:$0xf]
        %v684 = vld [vmem:[%s673 + $0x28] sm:$0xf]
        %v685 = vld [vmem:[%s673 + $0x2c] sm:$0xf]
        %v686 = vld [vmem:[%s673 + $0x30] sm:$0xf]
        %v687 = vld [vmem:[%s673 + $0x34] sm:$0xf]
        %v688 = vld [vmem:[%s673 + $0x38] sm:$0xf]
        %v689 = vld [vmem:[%s673 + $0x3c] sm:$0xf]
        %s690 = scalar_lea.vmem %s4, 4
        %v691 = vld [vmem:[%s690] sm:$0x1]
        %v693 = vperm.slane %v691, 0
        %v711 = vunpack.c.l.b16 %v674
        %v712 = vunpack.c.l.b16 %v675
        %v713 = vunpack.c.l.b16 %v676
        %v714 = vunpack.c.l.b16 %v677
        %v715 = vunpack.c.l.b16 %v678
        %v716 = vunpack.c.l.b16 %v679
        %v717 = vunpack.c.l.b16 %v680
        %v718 = vunpack.c.l.b16 %v681
        %v719 = vunpack.c.l.b16 %v682
        %v720 = vunpack.c.l.b16 %v683
        %v721 = vunpack.c.l.b16 %v684
        %v722 = vunpack.c.l.b16 %v685
        %v723 = vunpack.c.l.b16 %v686
        %v724 = vunpack.c.l.b16 %v687
        %v725 = vunpack.c.l.b16 %v688
        %v726 = vunpack.c.l.b16 %v689
        %v727 = vpack.c.b16 %v712, %v711
        %v728 = vpack.c.b16 %v714, %v713
        %v729 = vpack.c.b16 %v716, %v715
        %v730 = vpack.c.b16 %v718, %v717
        %v731 = vpack.c.b16 %v720, %v719
        %v732 = vpack.c.b16 %v722, %v721
        %v733 = vpack.c.b16 %v724, %v723
        %v734 = vpack.c.b16 %v726, %v725
        %743 = vmatpush.bf16.msra.mxu0 %v734
        %744 = vmatpush.bf16.msra.mxu0 %v733
        %745 = vmatpush.bf16.msra.mxu0 %v732
        %746 = vmatpush.bf16.msra.mxu0 %v731
        %747 = vmatpush.bf16.msra.mxu0 %v730
        %748 = vmatpush.bf16.msra.mxu0 %v729
        %749 = vmatpush.bf16.msra.mxu0 %v728
        %750 = vmatpush.bf16.msra.mxu0 %v727
        %751 = vmatmul.bf16.gmra.mxu0 %v672
        %v752 = vpop.f32.mrf.mxu0
        %v753 = vadd.f32 %v693, %v752
        %v754 = vpop.f32.mrf.mxu0
        %755 = vdwg.mxu0
        %v756 = vmax.f32 %v753, 0.0
        %v757 = vpack.c.bf16 %v756, %v756
        %758 = vst [vmem:[%s334] sm:$0xff] %v756
        %s759 = scalar_lea.vmem [#allocation5], 256
        %v760 = vld [vmem:[%s759] sm:$0xf]
        %v761 = vld [vmem:[%s759 + $0x4] sm:$0xf]
        %v762 = vld [vmem:[%s759 + $0x8] sm:$0xf]
        %v763 = vld [vmem:[%s759 + $0xc] sm:$0xf]
        %v764 = vld [vmem:[%s759 + $0x10] sm:$0xf]
        %v765 = vld [vmem:[%s759 + $0x14] sm:$0xf]
        %v766 = vld [vmem:[%s759 + $0x18] sm:$0xf]
        %v767 = vld [vmem:[%s759 + $0x1c] sm:$0xf]
        %v768 = vld [vmem:[%s759 + $0x20] sm:$0xf]
        %v769 = vld [vmem:[%s759 + $0x24] sm:$0xf]
        %v770 = vld [vmem:[%s759 + $0x28] sm:$0xf]
        %v771 = vld [vmem:[%s759 + $0x2c] sm:$0xf]
        %v772 = vld [vmem:[%s759 + $0x30] sm:$0xf]
        %v773 = vld [vmem:[%s759 + $0x34] sm:$0xf]
        %v774 = vld [vmem:[%s759 + $0x38] sm:$0xf]
        %v775 = vld [vmem:[%s759 + $0x3c] sm:$0xf]
        %s776 = scalar_lea.vmem %s4, 5
        %v777 = vld [vmem:[%s776] sm:$0x1]
        %v779 = vperm.slane %v777, 0
        %v797 = vunpack.c.l.b16 %v760
        %v798 = vunpack.c.l.b16 %v761
        %v799 = vunpack.c.l.b16 %v762
        %v800 = vunpack.c.l.b16 %v763
        %v801 = vunpack.c.l.b16 %v764
        %v802 = vunpack.c.l.b16 %v765
        %v803 = vunpack.c.l.b16 %v766
        %v804 = vunpack.c.l.b16 %v767
        %v805 = vunpack.c.l.b16 %v768
        %v806 = vunpack.c.l.b16 %v769
        %v807 = vunpack.c.l.b16 %v770
        %v808 = vunpack.c.l.b16 %v771
        %v809 = vunpack.c.l.b16 %v772
        %v810 = vunpack.c.l.b16 %v773
        %v811 = vunpack.c.l.b16 %v774
        %v812 = vunpack.c.l.b16 %v775
        %v813 = vpack.c.b16 %v798, %v797
        %v814 = vpack.c.b16 %v800, %v799
        %v815 = vpack.c.b16 %v802, %v801
        %v816 = vpack.c.b16 %v804, %v803
        %v817 = vpack.c.b16 %v806, %v805
        %v818 = vpack.c.b16 %v808, %v807
        %v819 = vpack.c.b16 %v810, %v809
        %v820 = vpack.c.b16 %v812, %v811
        %829 = vmatpush.bf16.msra.mxu0 %v820
        %830 = vmatpush.bf16.msra.mxu0 %v819
        %831 = vmatpush.bf16.msra.mxu0 %v818
        %832 = vmatpush.bf16.msra.mxu0 %v817
        %833 = vmatpush.bf16.msra.mxu0 %v816
        %834 = vmatpush.bf16.msra.mxu0 %v815
        %835 = vmatpush.bf16.msra.mxu0 %v814
        %836 = vmatpush.bf16.msra.mxu0 %v813
        %837 = vmatmul.bf16.gmra.mxu0 %v757
        %v838 = vpop.f32.mrf.mxu0
        %v839 = vadd.f32 %v779, %v838
        %v840 = vpop.f32.mrf.mxu0
        %841 = vdwg.mxu0
        %v842 = vmax.f32 %v839, 0.0
        %v843 = vpack.c.bf16 %v842, %v842
        %s844 = scalar_lea.vmem [#allocation5], 320
        %v845 = vld [vmem:[%s844] sm:$0xf]
        %v846 = vld [vmem:[%s844 + $0x4] sm:$0xf]
        %v847 = vld [vmem:[%s844 + $0x8] sm:$0xf]
        %v848 = vld [vmem:[%s844 + $0xc] sm:$0xf]
        %v849 = vld [vmem:[%s844 + $0x10] sm:$0xf]
        %v850 = vld [vmem:[%s844 + $0x14] sm:$0xf]
        %v851 = vld [vmem:[%s844 + $0x18] sm:$0xf]
        %v852 = vld [vmem:[%s844 + $0x1c] sm:$0xf]
        %v853 = vld [vmem:[%s844 + $0x20] sm:$0xf]
        %v854 = vld [vmem:[%s844 + $0x24] sm:$0xf]
        %v855 = vld [vmem:[%s844 + $0x28] sm:$0xf]
        %v856 = vld [vmem:[%s844 + $0x2c] sm:$0xf]
        %v857 = vld [vmem:[%s844 + $0x30] sm:$0xf]
        %v858 = vld [vmem:[%s844 + $0x34] sm:$0xf]
        %v859 = vld [vmem:[%s844 + $0x38] sm:$0xf]
        %v860 = vld [vmem:[%s844 + $0x3c] sm:$0xf]
        %s861 = scalar_lea.vmem %s4, 6
        %v862 = vld [vmem:[%s861] sm:$0x1]
        %v864 = vperm.slane %v862, 0
        %v882 = vunpack.c.l.b16 %v845
        %v883 = vunpack.c.l.b16 %v846
        %v884 = vunpack.c.l.b16 %v847
        %v885 = vunpack.c.l.b16 %v848
        %v886 = vunpack.c.l.b16 %v849
        %v887 = vunpack.c.l.b16 %v850
        %v888 = vunpack.c.l.b16 %v851
        %v889 = vunpack.c.l.b16 %v852
        %v890 = vunpack.c.l.b16 %v853
        %v891 = vunpack.c.l.b16 %v854
        %v892 = vunpack.c.l.b16 %v855
        %v893 = vunpack.c.l.b16 %v856
        %v894 = vunpack.c.l.b16 %v857
        %v895 = vunpack.c.l.b16 %v858
        %v896 = vunpack.c.l.b16 %v859
        %v897 = vunpack.c.l.b16 %v860
        %v898 = vpack.c.b16 %v883, %v882
        %v899 = vpack.c.b16 %v885, %v884
        %v900 = vpack.c.b16 %v887, %v886
        %v901 = vpack.c.b16 %v889, %v888
        %v902 = vpack.c.b16 %v891, %v890
        %v903 = vpack.c.b16 %v893, %v892
        %v904 = vpack.c.b16 %v895, %v894
        %v905 = vpack.c.b16 %v897, %v896
        %914 = vmatpush.bf16.msra.mxu0 %v905
        %915 = vmatpush.bf16.msra.mxu0 %v904
        %916 = vmatpush.bf16.msra.mxu0 %v903
        %917 = vmatpush.bf16.msra.mxu0 %v902
        %918 = vmatpush.bf16.msra.mxu0 %v901
        %919 = vmatpush.bf16.msra.mxu0 %v900
        %920 = vmatpush.bf16.msra.mxu0 %v899
        %921 = vmatpush.bf16.msra.mxu0 %v898
        %922 = vmatmul.bf16.gmra.mxu0 %v843
        %v923 = vpop.f32.mrf.mxu0
        %v924 = vadd.f32 %v864, %v923
        %v925 = vpop.f32.mrf.mxu0
        %926 = vdwg.mxu0
        %v927 = vmax.f32 %v924, 0.0
        %v928 = vpack.c.bf16 %v927, %v927
        %s929 = scalar_lea.vmem [#allocation5], 384
        %v930 = vld [vmem:[%s929] sm:$0xf]
        %v931 = vld [vmem:[%s929 + $0x4] sm:$0xf]
        %v932 = vld [vmem:[%s929 + $0x8] sm:$0xf]
        %v933 = vld [vmem:[%s929 + $0xc] sm:$0xf]
        %v934 = vld [vmem:[%s929 + $0x10] sm:$0xf]
        %v935 = vld [vmem:[%s929 + $0x14] sm:$0xf]
        %v936 = vld [vmem:[%s929 + $0x18] sm:$0xf]
        %v937 = vld [vmem:[%s929 + $0x1c] sm:$0xf]
        %v938 = vld [vmem:[%s929 + $0x20] sm:$0xf]
        %v939 = vld [vmem:[%s929 + $0x24] sm:$0xf]
        %v940 = vld [vmem:[%s929 + $0x28] sm:$0xf]
        %v941 = vld [vmem:[%s929 + $0x2c] sm:$0xf]
        %v942 = vld [vmem:[%s929 + $0x30] sm:$0xf]
        %v943 = vld [vmem:[%s929 + $0x34] sm:$0xf]
        %v944 = vld [vmem:[%s929 + $0x38] sm:$0xf]
        %v945 = vld [vmem:[%s929 + $0x3c] sm:$0xf]
        %s946 = scalar_lea.vmem %s4, 7
        %v947 = vld [vmem:[%s946] sm:$0x1]
        %v949 = vperm.slane %v947, 0
        %v967 = vunpack.c.l.b16 %v930
        %v968 = vunpack.c.l.b16 %v931
        %v969 = vunpack.c.l.b16 %v932
        %v970 = vunpack.c.l.b16 %v933
        %v971 = vunpack.c.l.b16 %v934
        %v972 = vunpack.c.l.b16 %v935
        %v973 = vunpack.c.l.b16 %v936
        %v974 = vunpack.c.l.b16 %v937
        %v975 = vunpack.c.l.b16 %v938
        %v976 = vunpack.c.l.b16 %v939
        %v977 = vunpack.c.l.b16 %v940
        %v978 = vunpack.c.l.b16 %v941
        %v979 = vunpack.c.l.b16 %v942
        %v980 = vunpack.c.l.b16 %v943
        %v981 = vunpack.c.l.b16 %v944
        %v982 = vunpack.c.l.b16 %v945
        %v983 = vpack.c.b16 %v968, %v967
        %v984 = vpack.c.b16 %v970, %v969
        %v985 = vpack.c.b16 %v972, %v971
        %v986 = vpack.c.b16 %v974, %v973
        %v987 = vpack.c.b16 %v976, %v975
        %v988 = vpack.c.b16 %v978, %v977
        %v989 = vpack.c.b16 %v980, %v979
        %v990 = vpack.c.b16 %v982, %v981
        %999 = vmatpush.bf16.msra.mxu0 %v990
        %1000 = vmatpush.bf16.msra.mxu0 %v989
        %1001 = vmatpush.bf16.msra.mxu0 %v988
        %1002 = vmatpush.bf16.msra.mxu0 %v987
        %1003 = vmatpush.bf16.msra.mxu0 %v986
        %1004 = vmatpush.bf16.msra.mxu0 %v985
        %1005 = vmatpush.bf16.msra.mxu0 %v984
        %1006 = vmatpush.bf16.msra.mxu0 %v983
        %1007 = vmatmul.bf16.gmra.mxu0 %v928
        %v1008 = vpop.f32.mrf.mxu0
        %v1009 = vadd.f32 %v949, %v1008
        %v1010 = vpop.f32.mrf.mxu0
        %1011 = vdwg.mxu0
        %v1012 = vmax.f32 %v1009, 0.0
        %v1013 = vpack.c.bf16 %v1012, %v1012
        %s1014 = scalar_lea.vmem [#allocation5], 448
        %v1015 = vld [vmem:[%s1014] sm:$0xf]
        %v1016 = vld [vmem:[%s1014 + $0x4] sm:$0xf]
        %v1017 = vld [vmem:[%s1014 + $0x8] sm:$0xf]
        %v1018 = vld [vmem:[%s1014 + $0xc] sm:$0xf]
        %v1019 = vld [vmem:[%s1014 + $0x10] sm:$0xf]
        %v1020 = vld [vmem:[%s1014 + $0x14] sm:$0xf]
        %v1021 = vld [vmem:[%s1014 + $0x18] sm:$0xf]
        %v1022 = vld [vmem:[%s1014 + $0x1c] sm:$0xf]
        %v1023 = vld [vmem:[%s1014 + $0x20] sm:$0xf]
        %v1024 = vld [vmem:[%s1014 + $0x24] sm:$0xf]
        %v1025 = vld [vmem:[%s1014 + $0x28] sm:$0xf]
        %v1026 = vld [vmem:[%s1014 + $0x2c] sm:$0xf]
        %v1027 = vld [vmem:[%s1014 + $0x30] sm:$0xf]
        %v1028 = vld [vmem:[%s1014 + $0x34] sm:$0xf]
        %v1029 = vld [vmem:[%s1014 + $0x38] sm:$0xf]
        %v1030 = vld [vmem:[%s1014 + $0x3c] sm:$0xf]
        %s1031 = scalar_lea.vmem %s4, 8
        %v1032 = vld [vmem:[%s1031] sm:$0x1]
        %v1034 = vperm.slane %v1032, 0
        %v1052 = vunpack.c.l.b16 %v1015
        %v1053 = vunpack.c.l.b16 %v1016
        %v1054 = vunpack.c.l.b16 %v1017
        %v1055 = vunpack.c.l.b16 %v1018
        %v1056 = vunpack.c.l.b16 %v1019
        %v1057 = vunpack.c.l.b16 %v1020
        %v1058 = vunpack.c.l.b16 %v1021
        %v1059 = vunpack.c.l.b16 %v1022
        %v1060 = vunpack.c.l.b16 %v1023
        %v1061 = vunpack.c.l.b16 %v1024
        %v1062 = vunpack.c.l.b16 %v1025
        %v1063 = vunpack.c.l.b16 %v1026
        %v1064 = vunpack.c.l.b16 %v1027
        %v1065 = vunpack.c.l.b16 %v1028
        %v1066 = vunpack.c.l.b16 %v1029
        %v1067 = vunpack.c.l.b16 %v1030
        %v1068 = vpack.c.b16 %v1053, %v1052
        %v1069 = vpack.c.b16 %v1055, %v1054
        %v1070 = vpack.c.b16 %v1057, %v1056
        %v1071 = vpack.c.b16 %v1059, %v1058
        %v1072 = vpack.c.b16 %v1061, %v1060
        %v1073 = vpack.c.b16 %v1063, %v1062
        %v1074 = vpack.c.b16 %v1065, %v1064
        %v1075 = vpack.c.b16 %v1067, %v1066
        %1084 = vmatpush.bf16.msra.mxu0 %v1075
        %1085 = vmatpush.bf16.msra.mxu0 %v1074
        %1086 = vmatpush.bf16.msra.mxu0 %v1073
        %1087 = vmatpush.bf16.msra.mxu0 %v1072
        %1088 = vmatpush.bf16.msra.mxu0 %v1071
        %1089 = vmatpush.bf16.msra.mxu0 %v1070
        %1090 = vmatpush.bf16.msra.mxu0 %v1069
        %1091 = vmatpush.bf16.msra.mxu0 %v1068
        %1092 = vmatmul.bf16.gmra.mxu0 %v1013
        %v1093 = vpop.f32.mrf.mxu0
        %v1094 = vadd.f32 %v1034, %v1093
        %v1095 = vpop.f32.mrf.mxu0
        %1096 = vdwg.mxu0
        %v1097 = vmax.f32 %v1094, 0.0
        %v1098 = vpack.c.bf16 %v1097, %v1097
        %v1099 = vld [vmem:[#allocation7] sm:$0xf]
        %v1100 = vld [vmem:[#allocation7 + $0x4] sm:$0xf]
        %v1101 = vld [vmem:[#allocation7 + $0x8] sm:$0xf]
        %v1102 = vld [vmem:[#allocation7 + $0xc] sm:$0xf]
        %v1103 = vld [vmem:[#allocation7 + $0x10] sm:$0xf]
        %v1104 = vld [vmem:[#allocation7 + $0x14] sm:$0xf]
        %v1105 = vld [vmem:[#allocation7 + $0x18] sm:$0xf]
        %v1106 = vld [vmem:[#allocation7 + $0x1c] sm:$0xf]
        %v1107 = vld [vmem:[#allocation7 + $0x20] sm:$0xf]
        %v1108 = vld [vmem:[#allocation7 + $0x24] sm:$0xf]
        %v1109 = vld [vmem:[#allocation7 + $0x28] sm:$0xf]
        %v1110 = vld [vmem:[#allocation7 + $0x2c] sm:$0xf]
        %v1111 = vld [vmem:[#allocation7 + $0x30] sm:$0xf]
        %v1112 = vld [vmem:[#allocation7 + $0x34] sm:$0xf]
        %v1113 = vld [vmem:[#allocation7 + $0x38] sm:$0xf]
        %v1114 = vld [vmem:[#allocation7 + $0x3c] sm:$0xf]
        %v1115 = vld [vmem:[%s5] sm:$0x1]
        %v1117 = vperm.slane %v1115, 0
        %v1135 = vunpack.c.l.b16 %v1099
        %v1136 = vunpack.c.l.b16 %v1100
        %v1137 = vunpack.c.l.b16 %v1101
        %v1138 = vunpack.c.l.b16 %v1102
        %v1139 = vunpack.c.l.b16 %v1103
        %v1140 = vunpack.c.l.b16 %v1104
        %v1141 = vunpack.c.l.b16 %v1105
        %v1142 = vunpack.c.l.b16 %v1106
        %v1143 = vunpack.c.l.b16 %v1107
        %v1144 = vunpack.c.l.b16 %v1108
        %v1145 = vunpack.c.l.b16 %v1109
        %v1146 = vunpack.c.l.b16 %v1110
        %v1147 = vunpack.c.l.b16 %v1111
        %v1148 = vunpack.c.l.b16 %v1112
        %v1149 = vunpack.c.l.b16 %v1113
        %v1150 = vunpack.c.l.b16 %v1114
        %v1151 = vpack.c.b16 %v1136, %v1135
        %v1152 = vpack.c.b16 %v1138, %v1137
        %v1153 = vpack.c.b16 %v1140, %v1139
        %v1154 = vpack.c.b16 %v1142, %v1141
        %v1155 = vpack.c.b16 %v1144, %v1143
        %v1156 = vpack.c.b16 %v1146, %v1145
        %v1157 = vpack.c.b16 %v1148, %v1147
        %v1158 = vpack.c.b16 %v1150, %v1149
        %1167 = vmatpush.bf16.msra.mxu0 %v1158
        %1168 = vmatpush.bf16.msra.mxu0 %v1157
        %1169 = vmatpush.bf16.msra.mxu0 %v1156
        %1170 = vmatpush.bf16.msra.mxu0 %v1155
        %1171 = vmatpush.bf16.msra.mxu0 %v1154
        %1172 = vmatpush.bf16.msra.mxu0 %v1153
        %1173 = vmatpush.bf16.msra.mxu0 %v1152
        %1174 = vmatpush.bf16.msra.mxu0 %v1151
        %1175 = vmatmul.bf16.gmra.mxu0 %v1098
        %v1176 = vpop.f32.mrf.mxu0
        %v1177 = vadd.f32 %v1117, %v1176
        %v1178 = vpop.f32.mrf.mxu0
        %1179 = vdwg.mxu0
        %1180 = vst [vmem:[%s320] sm:$0xff] %v1177
        %s1181 = sand.u32 %s163, 1
        %s1182 = scalar_lea.sflag [#allocation4], %s1181
        %s1183 = sand.u32 %s163, 1
        %s1184 = smul.addr %s1183, 8
        %s1185 = scalar_lea.vmem [#allocation8], %s1184
        %p1186 = scmp.lt.s32.totalorder %s24, 1
        %s1187 = scalar_select %p1186, %s24, 1
        %s1188 = smul.addr %s1187, 8
        %s1189 = scalar_lea.vmem %s7, %s1188
        // Predicated region
        $region57: #{aenet_forward.1} parent=43 // pred_check
          %p1190 = pneg %p173
        $region58: #{aenet_forward.1} parent=43 // pred_check_branch
          %1192 = sbr.rel (%p1190) target = $region60
        $region59: #{aenet_forward.1} parent=43 // pred_region
          %1194 = vsyncadd %s1182, 0
          %s1195 = smul.addr %s24, 8
          %s1196 = scalar_lea.hbm %s6, %s1195
          %s1198 = sshll.u32 %s1185, 4
          %s1199 = int_to_ptr.vmem [resolvable:$true] %s1198
          %s1200 = sshll.u32 %s1196, 4
          %s1201 = int_to_ptr.hbm [resolvable:$true] %s1200
          %1203 = dma.vmem_to_hbm [thread:$0]  %s1199, 128, %s1201, %s1182
        $region60: #{aenet_forward.1} parent=43 // pred_fallthru
          _
        // Predicated region
        $region61: #{aenet_forward.1} parent=43 // pred_check
          %p1204 = pneg %p199
        $region62: #{aenet_forward.1} parent=43 // pred_check_branch
          %1206 = sbr.rel (%p1204) target = $region64
        $region63: #{aenet_forward.1} parent=43 // pred_region
          _
        $region64: #{aenet_forward.1} parent=43 // pred_fallthru
          _
      $region44: #{aenet_forward.1} parent=5 // pred_fallthru
        _
      %p1207 = scmp.le.s32.totalorder 2, %s19
      // Predicated region
      $region65: #{aenet_forward.1} parent=5 // pred_check
        %p1208 = pneg %p1207
      $region66: #{aenet_forward.1} parent=5 // pred_check_branch
        %1210 = sbr.rel (%p1208) target = $region68
      $region67: #{aenet_forward.1} parent=5 // pred_region
        %s1211 = ssub.s32 %s19, 2
        // Predicated region
        $region69: #{aenet_forward.1} parent=67 // pred_check
          %p1212 = pneg %p179
        $region70: #{aenet_forward.1} parent=67 // pred_check_branch
          %1214 = sbr.rel (%p1212) target = $region72
        $region71: #{aenet_forward.1} parent=67 // pred_region
          %s1215 = sand.u32 %s164, 1
          %s1216 = scalar_lea.sflag [#allocation4], %s1215
          %s1217 = sand.u32 %s164, 1
          %s1218 = smul.addr %s1217, 8
          %s1219 = scalar_lea.vmem [#allocation8], %s1218
          %1221 = dma.done %s1216, 128
        $region72: #{aenet_forward.1} parent=67 // pred_fallthru
          _
        // Predicated region
        $region73: #{aenet_forward.1} parent=67 // pred_check
          %p1222 = pneg %p205
        $region74: #{aenet_forward.1} parent=67 // pred_check_branch
          %1224 = sbr.rel (%p1222) target = $region76
        $region75: #{aenet_forward.1} parent=67 // pred_region
          %p1225 = scmp.lt.s32.totalorder %s25, 1
          %s1226 = scalar_select %p1225, %s25, 1
          %s1227 = smul.addr %s1226, 8
          %s1228 = scalar_lea.vmem %s7, %s1227
        $region76: #{aenet_forward.1} parent=67 // pred_fallthru
          _
      $region68: #{aenet_forward.1} parent=5 // pred_fallthru
        _
    $region6: #{aenet_forward.1} parent=1 // loop_footer
      %s23 = sadd.s32 1, %s19
    $region7: #{aenet_forward.1} parent=1 // loop_footer_branch
      %18 = sbr.rel target = $region3
    $region8: #{aenet_forward.1} parent=1 // loop_exit
      _
    %1229 = vsyncpa [#allocation3], 1
    %s1230 = scalar_lea.sflag [#allocation3], 1
    %1231 = vsyncpa %s1230, 1
    %1232 = vsyncpa [#allocation6], 1
    %1233 = vsyncpa [#allocation4], 1
    %s1234 = scalar_lea.sflag [#allocation4], 1
    %1235 = vsyncpa %s1234, 1

</llo_original>
